<compile_context>
chip_gen: v7x
topology: tpu7x:2x2x1
jax: 0.10.0
libtpu: 0.0.40
codegen_flags: <defaults>
</compile_context>

<pallas_src>
import jax
import jax.numpy as jnp
from jax.experimental import pallas as pl
from jax.experimental.pallas import tpu as pltpu

EPS = 1e-5

# Minimum grid steps to keep the pipeline (and v7x's two TCs) busy.
_MIN_GRID_STEPS = 8
# Per-grid-step VMEM budget covering double-buffered I/O tiles + f32 temps.
_TILE_VMEM_BUDGET = 24 << 20
# Below this total byte count, plain XLA LayerNorm beats a Pallas launch.
_MIN_PALLAS_BYTES = 1 << 20
_MIN_PALLAS_ROWS = 64


def _round_up(a, m):
    return ((a + m - 1) // m) * m


def _vmem_capacity_bytes():
    try:
        return int(pltpu.get_tpu_info().vmem_capacity_bytes)
    except Exception:
        # Conservative fallback (v7x per-TC VMEM).
        return 64 * 1024 * 1024


def _layernorm_kernel(x_ref, g_ref, b_ref, o_ref):
    # x_ref: (tile_rows, D); g_ref/b_ref: (1, D) f32, VMEM-resident across the
    # grid (constant index_map). All moments/normalize math in f32 (v5e has no
    # bf16 VPU/EUP; the kernel is HBM-bound so f32 compute is free filler).
    x = x_ref[...].astype(jnp.float32)
    d = x.shape[-1]
    inv_d = 1.0 / d
    mean = jnp.sum(x, axis=-1, keepdims=True) * inv_d
    xc = x - mean
    var = jnp.sum(xc * xc, axis=-1, keepdims=True) * inv_d
    inv = jax.lax.rsqrt(var + EPS)
    o_ref[...] = (xc * inv * g_ref[...] + b_ref[...]).astype(o_ref.dtype)


def _pick_tile_rows(R, D, itemsize):
    # Per-element VMEM cost of one grid step:
    #   2 (double-buffer) * 2 (in + out) * itemsize   -> I/O tiles
    # + ~12 B                                         -> f32 working set
    per_elem = 4 * itemsize + 12
    tile_rows = _TILE_VMEM_BUDGET // (per_elem * D)
    # Cap so the grid keeps >= _MIN_GRID_STEPS steps (pipelining + v7x TCs).
    max_rows = _round_up(pl.cdiv(R, _MIN_GRID_STEPS), 8)
    tile_rows = min(tile_rows, max_rows)
    tile_rows = max(8, (tile_rows // 8) * 8)
    return int(tile_rows)


def layernorm_pallas(x2d, gamma, beta):
    """LayerNorm over last dim. x2d: (R, D); gamma/beta: (D,)."""
    R, D = x2d.shape
    itemsize = x2d.dtype.itemsize

    tile_rows = _pick_tile_rows(R, D, itemsize)
    grid = pl.cdiv(R, tile_rows)

    # Explicit scoped-VMEM limit: double-buffered I/O tiles + f32 temps +
    # gamma/beta + slack, clamped to 75% of physical VMEM.
    tile_elems = tile_rows * D
    needed = (4 * tile_elems * itemsize      # dbl-buffered in + out tiles
              + 12 * tile_elems              # f32 temporaries
              + 4 * 2 * D * 4                # gamma/beta (f32)
              + (2 << 20))                   # slack
    vmem_cap = _vmem_capacity_bytes()
    vmem_limit = max(min(int(needed), int(vmem_cap * 0.75)), 16 << 20)

    g = gamma.astype(jnp.float32).reshape(1, D)
    b = beta.astype(jnp.float32).reshape(1, D)

    # NOTE: when tile_rows does not divide R, the last block is partial; the
    # garbage rows in that block are per-row independent and are never written
    # back to HBM, so no wrapper-side pad/slice is needed.
    out = pl.pallas_call(
        _layernorm_kernel,
        out_shape=jax.ShapeDtypeStruct((R, D), x2d.dtype),
        grid_spec=pltpu.PrefetchScalarGridSpec(
            num_scalar_prefetch=0,
            grid=(grid,),
            in_specs=[
                pl.BlockSpec((tile_rows, D), lambda i: (i, 0)),
                pl.BlockSpec((1, D), lambda i: (0, 0)),
                pl.BlockSpec((1, D), lambda i: (0, 0)),
            ],
            out_specs=pl.BlockSpec((tile_rows, D), lambda i: (i, 0)),
        ),
        compiler_params=pltpu.CompilerParams(
            dimension_semantics=("parallel",),
            vmem_limit_bytes=vmem_limit,
        ),
    )(x2d, g, b)
    return out


def _layernorm_ref(x, gamma, beta):
    xf = x.astype(jnp.float32)
    mu = jnp.mean(xf, axis=-1, keepdims=True)
    var = jnp.mean((xf - mu) ** 2, axis=-1, keepdims=True)
    return (xf - mu) * jax.lax.rsqrt(var + EPS) * gamma + beta


def layernorm(x, gamma, beta):
    """LayerNorm over last dim for arbitrary leading dims. Returns x.dtype."""
    lead = x.shape[:-1]
    D = x.shape[-1]
    total_rows = 1
    for s in lead:
        total_rows *= s
    total_bytes = total_rows * D * x.dtype.itemsize
    # Lane-dense Pallas path only when D maps cleanly onto the 128-lane vreg
    # and the tensor is big enough to amortize launch + DMA overhead.
    if (D % 128 != 0
            or total_rows < _MIN_PALLAS_ROWS
            or total_bytes < _MIN_PALLAS_BYTES):
        return _layernorm_ref(x, gamma, beta).astype(x.dtype)
    y = layernorm_pallas(x.reshape(-1, D), gamma, beta)
    return y.reshape(*lead, D)


class PreNormPallas:
    """JAX/Pallas equivalent of the PyTorch PreNorm module.

    norm / context_norm parameters initialized as PyTorch's nn.LayerNorm
    does: weight = ones, bias = zeros (deterministic).
    """

    def __init__(self, dim, fn, context_dim=None):
        self.fn = fn
        self.dim = dim
        self.norm_gamma = jnp.ones((dim,), jnp.float32)
        self.norm_beta = jnp.zeros((dim,), jnp.float32)
        if context_dim is not None:
            self.ctx_gamma = jnp.ones((context_dim,), jnp.float32)
            self.ctx_beta = jnp.zeros((context_dim,), jnp.float32)
        else:
            self.ctx_gamma = None
            self.ctx_beta = None

    def __call__(self, x, **kwargs):
        x = layernorm(x, self.norm_gamma, self.norm_beta)
        if self.ctx_gamma is not None:
            context = kwargs["context"]
            normed_context = layernorm(context, self.ctx_gamma, self.ctx_beta)
            kwargs = dict(kwargs, context=normed_context)
        return self.fn(x, **kwargs)


if __name__ == "__main__":
    # Small shapes for the module demo (these use the size-gated XLA fallback,
    # which is the fast path at this scale); a larger standalone check below
    # exercises the Pallas LayerNorm kernel itself, including a ragged tail.
    B, N, D = 2, 8, 128
    M, C = 4, 64

    key = jax.random.PRNGKey(0)
    kx, kc, kw1, kw2, kbig = jax.random.split(key, 5)
    x = jax.random.normal(kx, (B, N, D), jnp.float32)
    context = jax.random.normal(kc, (B, M, C), jnp.float32)

    # Deterministic stand-in `fn` (the wrapped module is a black box in the
    # original): a linear projection of x plus a projection of mean-pooled
    # context. Glue math stays in plain JAX.
    W1 = jax.random.normal(kw1, (D, D), jnp.float32) * 0.02
    W2 = jax.random.normal(kw2, (C, D), jnp.float32) * 0.02

    def fn(x, context=None):
        out = x @ W1
        if context is not None:
            ctx_feat = jnp.mean(context, axis=1) @ W2      # (B, D)
            out = out + ctx_feat[:, None, :]               # broadcast over seq
        return out

    prenorm = PreNormPallas(dim=D, fn=fn, context_dim=C)
    out = jax.block_until_ready(prenorm(x, context=context))

    ref = fn(
        _layernorm_ref(x, prenorm.norm_gamma, prenorm.norm_beta),
        context=_layernorm_ref(context, prenorm.ctx_gamma, prenorm.ctx_beta),
    )
    assert out.shape == ref.shape
    assert jnp.allclose(out, ref, atol=1e-4, rtol=1e-4), (
        float(jnp.max(jnp.abs(out - ref)))
    )

    # Standalone check of the Pallas LayerNorm path: large enough to pass the
    # size gate, with a row count that is NOT a multiple of the chosen tile so
    # the ragged final block (partial writeback, no wrapper pad/slice) is
    # exercised; +3.0 offset checks the shifted-moment robustness.
    Dp = 256
    xr = jax.random.normal(kbig, (2100, Dp), jnp.float32) + 3.0
    gamma = jnp.linspace(0.5, 1.5, Dp, dtype=jnp.float32)
    beta = jnp.linspace(-0.2, 0.2, Dp, dtype=jnp.float32)
    y = jax.block_until_ready(layernorm(xr, gamma, beta))
    yr = _layernorm_ref(xr, gamma, beta)
    assert y.dtype == xr.dtype
    assert jnp.allclose(y, yr, atol=1e-4, rtol=1e-4), (
        float(jnp.max(jnp.abs(y - yr)))
    )

    print("KERNEL_OK")
</pallas_src>

<mosaic_0001>
module attributes {stable_mosaic.version = 11 : i64} {
  func.func @_layernorm_kernel(%arg0: i32, %arg1: memref<264x256xf32, #tpu.memory_space<vmem>>, %arg2: memref<1x256xf32, #tpu.memory_space<vmem>>, %arg3: memref<1x256xf32, #tpu.memory_space<vmem>>, %arg4: memref<264x256xf32, #tpu.memory_space<vmem>>) attributes {dimension_semantics = [#tpu.dimension_semantics<parallel>], iteration_bounds = array<i64: 8>, scalar_prefetch = 0 : i64, scratch_operands = 0 : i64, tpu.core_type = #tpu.core_type<tc>, window_params = [{transform_indices = @transform_0, window_bounds = array<i64: 264, 256>}, {pipeline_mode = #tpu.pipeline_mode<synchronous>, transform_indices = @transform_1, window_bounds = array<i64: 1, 256>}, {pipeline_mode = #tpu.pipeline_mode<synchronous>, transform_indices = @transform_2, window_bounds = array<i64: 1, 256>}, {transform_indices = @transform_3, window_bounds = array<i64: 264, 256>}]} {
    %c0 = arith.constant 0 : index
    %c0_0 = arith.constant 0 : index
    %0 = vector.load %arg1[%c0, %c0_0] : memref<264x256xf32, #tpu.memory_space<vmem>>, vector<264x256xf32>
    %cst = arith.constant dense<0.000000e+00> : vector<264xf32>
    %1 = vector.multi_reduction <add>, %0, %cst [1] : vector<264x256xf32> to vector<264xf32>
    %2 = vector.shape_cast %1 : vector<264xf32> to vector<264x1xf32>
    %cst_1 = arith.constant 3.906250e-03 : f32
    %3 = vector.broadcast %cst_1 : f32 to vector<264x1xf32>
    %4 = arith.mulf %2, %3 : vector<264x1xf32>
    %5 = vector.broadcast %4 : vector<264x1xf32> to vector<264x256xf32>
    %6 = arith.subf %0, %5 : vector<264x256xf32>
    %7 = arith.mulf %6, %6 : vector<264x256xf32>
    %cst_2 = arith.constant dense<0.000000e+00> : vector<264xf32>
    %8 = vector.multi_reduction <add>, %7, %cst_2 [1] : vector<264x256xf32> to vector<264xf32>
    %9 = vector.shape_cast %8 : vector<264xf32> to vector<264x1xf32>
    %cst_3 = arith.constant 3.906250e-03 : f32
    %10 = vector.broadcast %cst_3 : f32 to vector<264x1xf32>
    %11 = arith.mulf %9, %10 : vector<264x1xf32>
    %cst_4 = arith.constant 9.99999974E-6 : f32
    %12 = vector.broadcast %cst_4 : f32 to vector<264x1xf32>
    %13 = arith.addf %11, %12 : vector<264x1xf32>
    %14 = math.rsqrt %13 : vector<264x1xf32>
    %15 = vector.broadcast %14 : vector<264x1xf32> to vector<264x256xf32>
    %16 = arith.mulf %6, %15 : vector<264x256xf32>
    %c0_5 = arith.constant 0 : index
    %c0_6 = arith.constant 0 : index
    %17 = vector.load %arg2[%c0_5, %c0_6] : memref<1x256xf32, #tpu.memory_space<vmem>>, vector<1x256xf32>
    %18 = vector.broadcast %17 : vector<1x256xf32> to vector<264x256xf32>
    %19 = arith.mulf %16, %18 : vector<264x256xf32>
    %c0_7 = arith.constant 0 : index
    %c0_8 = arith.constant 0 : index
    %20 = vector.load %arg3[%c0_7, %c0_8] : memref<1x256xf32, #tpu.memory_space<vmem>>, vector<1x256xf32>
    %21 = vector.broadcast %20 : vector<1x256xf32> to vector<264x256xf32>
    %22 = arith.addf %19, %21 : vector<264x256xf32>
    %c0_9 = arith.constant 0 : index
    %c0_10 = arith.constant 0 : index
    %23 = vector.load %arg4[%c0_9, %c0_10] : memref<264x256xf32, #tpu.memory_space<vmem>>, vector<264x256xf32>
    tpu.vector_store %arg4[%c0_9, %c0_10], %22 {strides = array<i32>} : memref<264x256xf32, #tpu.memory_space<vmem>>, vector<264x256xf32>,
    return
  }
  func.func @transform_0(%arg0: i32) -> (i32, i32) {
    %c0_i32 = arith.constant 0 : i32
    %c0_i32_0 = arith.constant 0 : i32
    return %arg0, %c0_i32 : i32, i32
  }
  func.func @transform_1(%arg0: i32) -> (i32, i32) {
    %c0_i32 = arith.constant 0 : i32
    %c0_i32_0 = arith.constant 0 : i32
    %c0_i32_1 = arith.constant 0 : i32
    return %c0_i32, %c0_i32_0 : i32, i32
  }
  func.func @transform_2(%arg0: i32) -> (i32, i32) {
    %c0_i32 = arith.constant 0 : i32
    %c0_i32_0 = arith.constant 0 : i32
    %c0_i32_1 = arith.constant 0 : i32
    return %c0_i32, %c0_i32_0 : i32, i32
  }
  func.func @transform_3(%arg0: i32) -> (i32, i32) {
    %c0_i32 = arith.constant 0 : i32
    %c0_i32_0 = arith.constant 0 : i32
    return %arg0, %c0_i32 : i32, i32
  }
}

</mosaic_0001>

<llo_original>
// kernel: tpu_custom_call.1
$region0: #{tpu_custom_call.1}
  #allocation0 [shape = 'u32[]', space=smem, size = 0x4, offset = 0x4, fixed_abs, tag = 'smem constant byte address 0x4 - core index']
  #allocation1 [shape = 'u32[144,128]{1,0:T(1,128)}', space=vmem, size = 0x12000, scoped, tag = 'internal scratch']
  %s0 = inlined_call_operand.hbm [shape: f32[2100,256], index: 0, kind: input, shape index: {}]
  %s1 = inlined_call_operand.hbm [shape: f32[1,256], index: 1, kind: input, shape index: {}]
  %s2 = inlined_call_operand.hbm [shape: f32[1,256], index: 2, kind: input, shape index: {}]
  %s3 = inlined_call_operand.hbm [shape: f32[2100,256], index: 3, kind: output, shape index: {}]
  %s4 = sld [smem:[#allocation0]]
  $region57: #{tpu_custom_call.1} parent=0
    _
  %s6 = ssub.s32 1, %s4
  %s7 = scalar_select 0, %s6, %s4
  $region1: #{tpu_custom_call.1} parent=0
    #allocation2 [shape = 'u8[540672]{0}', space=vmem, size = 0x84000, scoped, tag = 'input window, operand 0']
    #allocation3 [shape = 's32[2]{0}', space=sflag, size = 0x8, scoped, tag = 'scoped memory for tpu_custom_call.1']
    #allocation4 [shape = 's32[2]{0}', space=sflag, size = 0x8, scoped, tag = 'scoped memory for tpu_custom_call.1']
    #allocation5 [shape = 'u8[1024]{0}', space=vmem, size = 0x400, scoped, tag = 'input window, operand 1, single buffered']
    #allocation6 [shape = 's32[1]{0}', space=sflag, size = 0x4, scoped, tag = 'scoped memory for tpu_custom_call.1']
    #allocation7 [shape = 'u8[1024]{0}', space=vmem, size = 0x400, scoped, tag = 'input window, operand 2, single buffered']
    #allocation8 [shape = 'u8[540672]{0}', space=vmem, size = 0x84000, scoped, tag = 'output window, operand 0']
    %8 = vsyncpa [#allocation3], 0
    %s9 = scalar_lea.sflag [#allocation3], 1
    %10 = vsyncpa %s9, 0
    %11 = vsyncpa [#allocation6], 0
    %12 = vsyncpa [#allocation4], 0
    %s13 = scalar_lea.sflag [#allocation4], 1
    %14 = vsyncpa %s13, 0
    loop: start=0, step=1, limit=10
    $region2: #{tpu_custom_call.1} parent=1 // loop_pre_header
      _
    $region3: #{tpu_custom_call.1} parent=1 // loop_header
      %s16 = sphi 0, %s20
      %p17 = scmp.ge.s32.totalorder %s16, 10
      %s26 = sphi 0, %s28
      %s29 = sphi 0, %s26
      %s30 = sphi 0, %s29
      %s46 = sphi 0, %s30
      %s50 = sphi 0, %s50
      %s52 = sphi 0, %s50
      %s53 = sphi 0, %s52
      %s67 = sphi 0, %s53
      %s71 = sphi 0, %s71
      %s73 = sphi 0, %s71
      %s74 = sphi 0, %s73
      %s88 = sphi 0, %s74
      %s94 = sphi 0, %s96
      %s97 = sphi 0, %s94
      %s98 = sphi 0, %s97
      %s114 = sphi 0, %s98
    $region4: #{tpu_custom_call.1} parent=1 // loop_header_branch
      %19 = sbr.rel (%p17) target = $region8
    $region5: #{tpu_custom_call.1} parent=1 // loop_body
      %s21 = ssub.s32 %s16, 1
      %s22 = ssub.s32 %s16, 2
      %s23 = sadd.s32 %s16, 1
      %s24 = ssub.s32 %s16, %s23
      %p25 = scmp.eq.s32.totalorder %s24, 0
      %s27 = sadd.s32 %s26, 1
      %s28 = scalar_select %p25, %s26, %s27
      %p31 = pneg %p25
      %p32 = scmp.eq.s32.totalorder %s16, 7
      %p33 = por %p31, %p32
      %p34 = scmp.ne.s32.totalorder %s26, %s29
      %p35 = scmp.eq.s32.totalorder %s16, 0
      %p36 = por %p34, %p35
      %p37 = scmp.ne.s32.totalorder %s26, %s29
      %p38 = scmp.eq.s32.totalorder %s21, 7
      %p39 = por %p37, %p38
      %p40 = scmp.ne.s32.totalorder %s29, %s30
      %p41 = scmp.eq.s32.totalorder %s21, 0
      %p42 = por %p40, %p41
      %p43 = scmp.ne.s32.totalorder %s29, %s30
      %p44 = scmp.eq.s32.totalorder %s22, 7
      %p45 = por %p43, %p44
      %p47 = scmp.ne.s32.totalorder %s30, %s46
      %p48 = scmp.eq.s32.totalorder %s22, 0
      %p49 = por %p47, %p48
      %s51 = sadd.s32 %s50, 1
      %p54 = scmp.eq.s32.totalorder %s16, 7
      %p55 = scmp.ne.s32.totalorder %s50, %s52
      %p56 = scmp.eq.s32.totalorder %s16, 0
      %p57 = por %p55, %p56
      %p58 = scmp.ne.s32.totalorder %s50, %s52
      %p59 = scmp.eq.s32.totalorder %s21, 7
      %p60 = por %p58, %p59
      %p61 = scmp.ne.s32.totalorder %s52, %s53
      %p62 = scmp.eq.s32.totalorder %s21, 0
      %p63 = por %p61, %p62
      %p64 = scmp.ne.s32.totalorder %s52, %s53
      %p65 = scmp.eq.s32.totalorder %s22, 7
      %p66 = por %p64, %p65
      %p68 = scmp.ne.s32.totalorder %s53, %s67
      %p69 = scmp.eq.s32.totalorder %s22, 0
      %p70 = por %p68, %p69
      %s72 = sadd.s32 %s71, 1
      %p75 = scmp.eq.s32.totalorder %s16, 7
      %p76 = scmp.ne.s32.totalorder %s71, %s73
      %p77 = scmp.eq.s32.totalorder %s16, 0
      %p78 = por %p76, %p77
      %p79 = scmp.ne.s32.totalorder %s71, %s73
      %p80 = scmp.eq.s32.totalorder %s21, 7
      %p81 = por %p79, %p80
      %p82 = scmp.ne.s32.totalorder %s73, %s74
      %p83 = scmp.eq.s32.totalorder %s21, 0
      %p84 = por %p82, %p83
      %p85 = scmp.ne.s32.totalorder %s73, %s74
      %p86 = scmp.eq.s32.totalorder %s22, 7
      %p87 = por %p85, %p86
      %p89 = scmp.ne.s32.totalorder %s74, %s88
      %p90 = scmp.eq.s32.totalorder %s22, 0
      %p91 = por %p89, %p90
      %s92 = ssub.s32 %s16, %s23
      %p93 = scmp.eq.s32.totalorder %s92, 0
      %s95 = sadd.s32 %s94, 1
      %s96 = scalar_select %p93, %s94, %s95
      %p99 = pneg %p93
      %p100 = scmp.eq.s32.totalorder %s16, 7
      %p101 = por %p99, %p100
      %p102 = scmp.ne.s32.totalorder %s94, %s97
      %p103 = scmp.eq.s32.totalorder %s16, 0
      %p104 = por %p102, %p103
      %p105 = scmp.ne.s32.totalorder %s94, %s97
      %p106 = scmp.eq.s32.totalorder %s21, 7
      %p107 = por %p105, %p106
      %p108 = scmp.ne.s32.totalorder %s97, %s98
      %p109 = scmp.eq.s32.totalorder %s21, 0
      %p110 = por %p108, %p109
      %p111 = scmp.ne.s32.totalorder %s97, %s98
      %p112 = scmp.eq.s32.totalorder %s22, 7
      %p113 = por %p111, %p112
      %p115 = scmp.ne.s32.totalorder %s98, %s114
      %p116 = scmp.eq.s32.totalorder %s22, 0
      %p117 = por %p115, %p116
      %p118 = scmp.le.s32.totalorder 1, %s16
      %p119 = scmp.lt.s32.totalorder %s16, 9
      %p120 = pnand %p118, %p119
      %p121 = pneg %p120
      // Predicated region
      $region9: #{tpu_custom_call.1} parent=5 // pred_check
        _
      $region10: #{tpu_custom_call.1} parent=5 // pred_check_branch
        %123 = sbr.rel (%p120) target = $region12
      $region11: #{tpu_custom_call.1} parent=5 // pred_region
        %s124 = ssub.s32 %s16, 1
        // Predicated region
        $region13: #{tpu_custom_call.1} parent=11 // pred_check
          %p125 = pneg %p63
        $region14: #{tpu_custom_call.1} parent=11 // pred_check_branch
          %127 = sbr.rel (%p125) target = $region16
        $region15: #{tpu_custom_call.1} parent=11 // pred_region
          %s129 = ssub.s32 32, 32
          %130 = vsyncadd [#allocation6], %s129
          %s132 = sshll.u32 [#allocation5], 4
          %s133 = int_to_ptr.vmem [resolvable:$true] %s132
          %135 = dma.hbm_to_vmem [thread:$0]  %s1, 32, %s133, [#allocation6]
        $region16: #{tpu_custom_call.1} parent=11 // pred_fallthru
          _
        // Predicated region
        $region17: #{tpu_custom_call.1} parent=11 // pred_check
          %p136 = pneg %p84
        $region18: #{tpu_custom_call.1} parent=11 // pred_check_branch
          %138 = sbr.rel (%p136) target = $region20
        $region19: #{tpu_custom_call.1} parent=11 // pred_region
          %s140 = ssub.s32 32, 32
          %141 = vsyncadd [#allocation6], %s140
          %s143 = sshll.u32 [#allocation7], 4
          %s144 = int_to_ptr.vmem [resolvable:$true] %s143
          %146 = dma.hbm_to_vmem [thread:$0]  %s2, 32, %s144, [#allocation6]
        $region20: #{tpu_custom_call.1} parent=11 // pred_fallthru
          _
      $region12: #{tpu_custom_call.1} parent=5 // pred_fallthru
        _
      %p147 = scmp.lt.s32.totalorder %s16, 8
      // Predicated region
      $region21: #{tpu_custom_call.1} parent=5 // pred_check
        %p148 = pneg %p147
      $region22: #{tpu_custom_call.1} parent=5 // pred_check_branch
        %150 = sbr.rel (%p148) target = $region24
      $region23: #{tpu_custom_call.1} parent=5 // pred_region
        // Predicated region
        $region25: #{tpu_custom_call.1} parent=23 // pred_check
          %p151 = pneg %p36
        $region26: #{tpu_custom_call.1} parent=23 // pred_check_branch
          %153 = sbr.rel (%p151) target = $region28
        $region27: #{tpu_custom_call.1} parent=23 // pred_region
          %s154 = sand.u32 %s26, 1
          %s155 = scalar_lea.sflag [#allocation3], %s154
          %s156 = sand.u32 %s26, 1
          %s157 = smul.addr %s156, 528
          %s158 = scalar_lea.vmem [#allocation2], %s157
          %s159 = smul.u32 33, %s16
          %s160 = ssub.s32 263, %s159
          %p161 = scmp.lt.s32.totalorder %s160, 33
          %s162 = scalar_select %p161, %s160, 33
          %s163 = smul.u32 128, %s162
          %s164 = smul.u32 %s163, 2
          %s166 = ssub.s32 8448, %s164
          %167 = vsyncadd %s155, %s166
          %p168 = scmp.ne.s32.totalorder 0, %s164
          %s169 = smul.addr %s159, 2
          %s170 = smul.addr %s169, 128
          %s171 = scalar_lea.hbm %s0, %s170
          %s172 = smul.u32 16, %s162
          %s173 = sshll.u32 %s158, 4
          %s174 = int_to_ptr.vmem [resolvable:$true] %s173
          %s175 = sshll.u32 %s172, 4
          %179 = dma.hbm_to_vmem [thread:$0]  (%p168), %s171, %s175, %s174, %s155, 256, 256, 16
        $region28: #{tpu_custom_call.1} parent=23 // pred_fallthru
          _
      $region24: #{tpu_custom_call.1} parent=5 // pred_fallthru
        _
      %p180 = scmp.le.s32.totalorder 1, %s16
      %p181 = scmp.lt.s32.totalorder %s16, 9
      %p182 = pnand %p180, %p181
      %p183 = pneg %p182
      // Predicated region
      $region29: #{tpu_custom_call.1} parent=5 // pred_check
        _
      $region30: #{tpu_custom_call.1} parent=5 // pred_check_branch
        %185 = sbr.rel (%p182) target = $region32
      $region31: #{tpu_custom_call.1} parent=5 // pred_region
        %s186 = ssub.s32 %s16, 1
        %s187 = sand.u32 %s29, 1
        %s188 = scalar_lea.sflag [#allocation3], %s187
        %s189 = sand.u32 %s29, 1
        %s190 = smul.addr %s189, 528
        %s191 = scalar_lea.vmem [#allocation2], %s190
        // Predicated region
        $region33: #{tpu_custom_call.1} parent=31 // pred_check
          %p192 = pneg %p42
        $region34: #{tpu_custom_call.1} parent=31 // pred_check_branch
          %194 = sbr.rel (%p192) target = $region36
        $region35: #{tpu_custom_call.1} parent=31 // pred_region
          %195 = dma.done %s188, 8448
        $region36: #{tpu_custom_call.1} parent=31 // pred_fallthru
          _
        // Predicated region
        $region37: #{tpu_custom_call.1} parent=31 // pred_check
          %p196 = pneg %p63
        $region38: #{tpu_custom_call.1} parent=31 // pred_check_branch
          %198 = sbr.rel (%p196) target = $region40
        $region39: #{tpu_custom_call.1} parent=31 // pred_region
          %199 = dma.done [#allocation6], 32
        $region40: #{tpu_custom_call.1} parent=31 // pred_fallthru
          _
        // Predicated region
        $region41: #{tpu_custom_call.1} parent=31 // pred_check
          %p200 = pneg %p84
        $region42: #{tpu_custom_call.1} parent=31 // pred_check_branch
          %202 = sbr.rel (%p200) target = $region44
        $region43: #{tpu_custom_call.1} parent=31 // pred_region
          %203 = dma.done [#allocation6], 32
        $region44: #{tpu_custom_call.1} parent=31 // pred_fallthru
          _
        %s204 = sand.u32 %s29, 1
        %s205 = scalar_lea.sflag [#allocation3], %s204
        %s206 = sand.u32 %s29, 1
        %s207 = smul.addr %s206, 528
        %s208 = scalar_lea.vmem [#allocation2], %s207
        %p209 = pneg %p42
        %p210 = pneg %p39
        %p211 = pneg %p63
        %p212 = pneg %p60
        %p213 = pneg %p84
        %p214 = pneg %p81
        %p215 = pneg %p110
        %p216 = pneg %p107
        %s217 = sand.u32 %s97, 1
        %s218 = scalar_lea.sflag [#allocation4], %s217
        %s219 = sand.u32 %s97, 1
        %s220 = smul.addr %s219, 528
        %s221 = scalar_lea.vmem [#allocation8], %s220
        %s222 = smul.u32 33, %s21
        %s223 = ssub.s32 263, %s222
        %p224 = scmp.lt.s32.totalorder %s223, 33
        %s225 = scalar_select %p224, %s223, 33
        %s226 = smul.u32 128, %s225
        %s227 = smul.u32 %s226, 2
        %s228 = smul.u32 33, %s21
        %s229 = ssub.s32 263, %s228
        %p230 = scmp.lt.s32.totalorder %s229, 33
        %s231 = scalar_select %p230, %s229, 33
        %s232 = smul.u32 128, %s231
        %s233 = smul.u32 %s232, 2
        %v234 = vld [vmem:[%s191] sm:$0xff]
        %v235 = vld [vmem:[%s191 + $0x8] sm:$0xff]
        %v236 = vld [vmem:[%s191 + $0x10] sm:$0xff]
        %v237 = vld [vmem:[%s191 + $0x18] sm:$0xff]
        %v238 = vld [vmem:[%s191 + $0x20] sm:$0xff]
        %v239 = vld [vmem:[%s191 + $0x28] sm:$0xff]
        %v240 = vld [vmem:[%s191 + $0x30] sm:$0xff]
        %v241 = vld [vmem:[%s191 + $0x38] sm:$0xff]
        %v242 = vld [vmem:[%s191 + $0x40] sm:$0xff]
        %v243 = vld [vmem:[%s191 + $0x48] sm:$0xff]
        %v244 = vld [vmem:[%s191 + $0x50] sm:$0xff]
        %v245 = vld [vmem:[%s191 + $0x58] sm:$0xff]
        %v246 = vld [vmem:[%s191 + $0x60] sm:$0xff]
        %v247 = vld [vmem:[%s191 + $0x68] sm:$0xff]
        %v248 = vld [vmem:[%s191 + $0x70] sm:$0xff]
        %v249 = vld [vmem:[%s191 + $0x78] sm:$0xff]
        %v250 = vld [vmem:[%s191 + $0x80] sm:$0xff]
        %v251 = vld [vmem:[%s191 + $0x88] sm:$0xff]
        %v252 = vld [vmem:[%s191 + $0x90] sm:$0xff]
        %v253 = vld [vmem:[%s191 + $0x98] sm:$0xff]
        %v254 = vld [vmem:[%s191 + $0xa0] sm:$0xff]
        %v255 = vld [vmem:[%s191 + $0xa8] sm:$0xff]
        %v256 = vld [vmem:[%s191 + $0xb0] sm:$0xff]
        %v257 = vld [vmem:[%s191 + $0xb8] sm:$0xff]
        %v258 = vld [vmem:[%s191 + $0xc0] sm:$0xff]
        %v259 = vld [vmem:[%s191 + $0xc8] sm:$0xff]
        %v260 = vld [vmem:[%s191 + $0xd0] sm:$0xff]
        %v261 = vld [vmem:[%s191 + $0xd8] sm:$0xff]
        %v262 = vld [vmem:[%s191 + $0xe0] sm:$0xff]
        %v263 = vld [vmem:[%s191 + $0xe8] sm:$0xff]
        %v264 = vld [vmem:[%s191 + $0xf0] sm:$0xff]
        %v265 = vld [vmem:[%s191 + $0xf8] sm:$0xff]
        %v266 = vld [vmem:[%s191 + $0x100] sm:$0xff]
        %v267 = vld [vmem:[%s191 + $0x108] sm:$0xff]
        %v268 = vld [vmem:[%s191 + $0x110] sm:$0xff]
        %v269 = vld [vmem:[%s191 + $0x118] sm:$0xff]
        %v270 = vld [vmem:[%s191 + $0x120] sm:$0xff]
        %v271 = vld [vmem:[%s191 + $0x128] sm:$0xff]
        %v272 = vld [vmem:[%s191 + $0x130] sm:$0xff]
        %v273 = vld [vmem:[%s191 + $0x138] sm:$0xff]
        %v274 = vld [vmem:[%s191 + $0x140] sm:$0xff]
        %v275 = vld [vmem:[%s191 + $0x148] sm:$0xff]
        %v276 = vld [vmem:[%s191 + $0x150] sm:$0xff]
        %v277 = vld [vmem:[%s191 + $0x158] sm:$0xff]
        %v278 = vld [vmem:[%s191 + $0x160] sm:$0xff]
        %v279 = vld [vmem:[%s191 + $0x168] sm:$0xff]
        %v280 = vld [vmem:[%s191 + $0x170] sm:$0xff]
        %v281 = vld [vmem:[%s191 + $0x178] sm:$0xff]
        %v282 = vld [vmem:[%s191 + $0x180] sm:$0xff]
        %v283 = vld [vmem:[%s191 + $0x188] sm:$0xff]
        %v284 = vld [vmem:[%s191 + $0x190] sm:$0xff]
        %v285 = vld [vmem:[%s191 + $0x198] sm:$0xff]
        %v286 = vld [vmem:[%s191 + $0x1a0] sm:$0xff]
        %v287 = vld [vmem:[%s191 + $0x1a8] sm:$0xff]
        %v288 = vld [vmem:[%s191 + $0x1b0] sm:$0xff]
        %v289 = vld [vmem:[%s191 + $0x1b8] sm:$0xff]
        %v290 = vld [vmem:[%s191 + $0x1c0] sm:$0xff]
        %v291 = vld [vmem:[%s191 + $0x1c8] sm:$0xff]
        %v292 = vld [vmem:[%s191 + $0x1d0] sm:$0xff]
        %v293 = vld [vmem:[%s191 + $0x1d8] sm:$0xff]
        %v294 = vld [vmem:[%s191 + $0x1e0] sm:$0xff]
        %v295 = vld [vmem:[%s191 + $0x1e8] sm:$0xff]
        %v296 = vld [vmem:[%s191 + $0x1f0] sm:$0xff]
        %v297 = vld [vmem:[%s191 + $0x1f8] sm:$0xff]
        %v298 = vld [vmem:[%s191 + $0x200] sm:$0xff]
        %v299 = vld [vmem:[%s191 + $0x208] sm:$0xff]
        %v300 = vadd.f32 %v234, %v235
        %301 = vadd.xlane.f32.xlu0 %v300
        %v302 = vpop.xlane.xlu0 %301
        %v303 = vadd.f32 %v236, %v237
        %304 = vadd.xlane.f32.xlu0 %v303
        %v305 = vpop.xlane.xlu0 %304
        %v306 = vadd.f32 %v238, %v239
        %307 = vadd.xlane.f32.xlu0 %v306
        %v308 = vpop.xlane.xlu0 %307
        %v309 = vadd.f32 %v240, %v241
        %310 = vadd.xlane.f32.xlu0 %v309
        %v311 = vpop.xlane.xlu0 %310
        %v312 = vadd.f32 %v242, %v243
        %313 = vadd.xlane.f32.xlu0 %v312
        %v314 = vpop.xlane.xlu0 %313
        %v315 = vadd.f32 %v244, %v245
        %316 = vadd.xlane.f32.xlu0 %v315
        %v317 = vpop.xlane.xlu0 %316
        %v318 = vadd.f32 %v246, %v247
        %319 = vadd.xlane.f32.xlu0 %v318
        %v320 = vpop.xlane.xlu0 %319
        %v321 = vadd.f32 %v248, %v249
        %322 = vadd.xlane.f32.xlu0 %v321
        %v323 = vpop.xlane.xlu0 %322
        %v324 = vadd.f32 %v250, %v251
        %325 = vadd.xlane.f32.xlu0 %v324
        %v326 = vpop.xlane.xlu0 %325
        %v327 = vadd.f32 %v252, %v253
        %328 = vadd.xlane.f32.xlu0 %v327
        %v329 = vpop.xlane.xlu0 %328
        %v330 = vadd.f32 %v254, %v255
        %331 = vadd.xlane.f32.xlu0 %v330
        %v332 = vpop.xlane.xlu0 %331
        %v333 = vadd.f32 %v256, %v257
        %334 = vadd.xlane.f32.xlu0 %v333
        %v335 = vpop.xlane.xlu0 %334
        %v336 = vadd.f32 %v258, %v259
        %337 = vadd.xlane.f32.xlu0 %v336
        %v338 = vpop.xlane.xlu0 %337
        %v339 = vadd.f32 %v260, %v261
        %340 = vadd.xlane.f32.xlu0 %v339
        %v341 = vpop.xlane.xlu0 %340
        %v342 = vadd.f32 %v262, %v263
        %343 = vadd.xlane.f32.xlu0 %v342
        %v344 = vpop.xlane.xlu0 %343
        %v345 = vadd.f32 %v264, %v265
        %346 = vadd.xlane.f32.xlu0 %v345
        %v347 = vpop.xlane.xlu0 %346
        %v348 = vadd.f32 %v266, %v267
        %349 = vadd.xlane.f32.xlu0 %v348
        %v350 = vpop.xlane.xlu0 %349
        %v351 = vadd.f32 %v268, %v269
        %352 = vadd.xlane.f32.xlu0 %v351
        %v353 = vpop.xlane.xlu0 %352
        %v354 = vadd.f32 %v270, %v271
        %355 = vadd.xlane.f32.xlu0 %v354
        %v356 = vpop.xlane.xlu0 %355
        %v357 = vadd.f32 %v272, %v273
        %358 = vadd.xlane.f32.xlu0 %v357
        %v359 = vpop.xlane.xlu0 %358
        %v360 = vadd.f32 %v274, %v275
        %361 = vadd.xlane.f32.xlu0 %v360
        %v362 = vpop.xlane.xlu0 %361
        %v363 = vadd.f32 %v276, %v277
        %364 = vadd.xlane.f32.xlu0 %v363
        %v365 = vpop.xlane.xlu0 %364
        %v366 = vadd.f32 %v278, %v279
        %367 = vadd.xlane.f32.xlu0 %v366
        %v368 = vpop.xlane.xlu0 %367
        %v369 = vadd.f32 %v280, %v281
        %370 = vadd.xlane.f32.xlu0 %v369
        %v371 = vpop.xlane.xlu0 %370
        %v372 = vadd.f32 %v282, %v283
        %373 = vadd.xlane.f32.xlu0 %v372
        %v374 = vpop.xlane.xlu0 %373
        %v375 = vadd.f32 %v284, %v285
        %376 = vadd.xlane.f32.xlu0 %v375
        %v377 = vpop.xlane.xlu0 %376
        %v378 = vadd.f32 %v286, %v287
        %379 = vadd.xlane.f32.xlu0 %v378
        %v380 = vpop.xlane.xlu0 %379
        %v381 = vadd.f32 %v288, %v289
        %382 = vadd.xlane.f32.xlu0 %v381
        %v383 = vpop.xlane.xlu0 %382
        %v384 = vadd.f32 %v290, %v291
        %385 = vadd.xlane.f32.xlu0 %v384
        %v386 = vpop.xlane.xlu0 %385
        %v387 = vadd.f32 %v292, %v293
        %388 = vadd.xlane.f32.xlu0 %v387
        %v389 = vpop.xlane.xlu0 %388
        %v390 = vadd.f32 %v294, %v295
        %391 = vadd.xlane.f32.xlu0 %v390
        %v392 = vpop.xlane.xlu0 %391
        %v393 = vadd.f32 %v296, %v297
        %394 = vadd.xlane.f32.xlu0 %v393
        %v395 = vpop.xlane.xlu0 %394
        %v396 = vadd.f32 %v298, %v299
        %397 = vadd.xlane.f32.xlu0 %v396
        %v398 = vpop.xlane.xlu0 %397
        %v399 = vmul.f32 %v302, 0.00390625
        %v400 = vmul.f32 %v305, 0.00390625
        %v401 = vmul.f32 %v308, 0.00390625
        %v402 = vmul.f32 %v311, 0.00390625
        %v403 = vmul.f32 %v314, 0.00390625
        %v404 = vmul.f32 %v317, 0.00390625
        %v405 = vmul.f32 %v320, 0.00390625
        %v406 = vmul.f32 %v323, 0.00390625
        %v407 = vmul.f32 %v326, 0.00390625
        %v408 = vmul.f32 %v329, 0.00390625
        %v409 = vmul.f32 %v332, 0.00390625
        %v410 = vmul.f32 %v335, 0.00390625
        %v411 = vmul.f32 %v338, 0.00390625
        %v412 = vmul.f32 %v341, 0.00390625
        %v413 = vmul.f32 %v344, 0.00390625
        %v414 = vmul.f32 %v347, 0.00390625
        %v415 = vmul.f32 %v350, 0.00390625
        %v416 = vmul.f32 %v353, 0.00390625
        %v417 = vmul.f32 %v356, 0.00390625
        %v418 = vmul.f32 %v359, 0.00390625
        %v419 = vmul.f32 %v362, 0.00390625
        %v420 = vmul.f32 %v365, 0.00390625
        %v421 = vmul.f32 %v368, 0.00390625
        %v422 = vmul.f32 %v371, 0.00390625
        %v423 = vmul.f32 %v374, 0.00390625
        %v424 = vmul.f32 %v377, 0.00390625
        %v425 = vmul.f32 %v380, 0.00390625
        %v426 = vmul.f32 %v383, 0.00390625
        %v427 = vmul.f32 %v386, 0.00390625
        %v428 = vmul.f32 %v389, 0.00390625
        %v429 = vmul.f32 %v392, 0.00390625
        %v430 = vmul.f32 %v395, 0.00390625
        %v431 = vmul.f32 %v398, 0.00390625
        %v432 = vsub.f32 %v234, %v399
        %v433 = vsub.f32 %v235, %v399
        %v434 = vsub.f32 %v236, %v400
        %v435 = vsub.f32 %v237, %v400
        %v436 = vsub.f32 %v238, %v401
        %v437 = vsub.f32 %v239, %v401
        %v438 = vsub.f32 %v240, %v402
        %v439 = vsub.f32 %v241, %v402
        %v440 = vsub.f32 %v242, %v403
        %v441 = vsub.f32 %v243, %v403
        %v442 = vsub.f32 %v244, %v404
        %v443 = vsub.f32 %v245, %v404
        %v444 = vsub.f32 %v246, %v405
        %v445 = vsub.f32 %v247, %v405
        %v446 = vsub.f32 %v248, %v406
        %v447 = vsub.f32 %v249, %v406
        %v448 = vsub.f32 %v250, %v407
        %v449 = vsub.f32 %v251, %v407
        %v450 = vsub.f32 %v252, %v408
        %v451 = vsub.f32 %v253, %v408
        %v452 = vsub.f32 %v254, %v409
        %v453 = vsub.f32 %v255, %v409
        %v454 = vsub.f32 %v256, %v410
        %v455 = vsub.f32 %v257, %v410
        %v456 = vsub.f32 %v258, %v411
        %v457 = vsub.f32 %v259, %v411
        %v458 = vsub.f32 %v260, %v412
        %v459 = vsub.f32 %v261, %v412
        %v460 = vsub.f32 %v262, %v413
        %v461 = vsub.f32 %v263, %v413
        %v462 = vsub.f32 %v264, %v414
        %v463 = vsub.f32 %v265, %v414
        %v464 = vsub.f32 %v266, %v415
        %v465 = vsub.f32 %v267, %v415
        %v466 = vsub.f32 %v268, %v416
        %v467 = vsub.f32 %v269, %v416
        %v468 = vsub.f32 %v270, %v417
        %v469 = vsub.f32 %v271, %v417
        %v470 = vsub.f32 %v272, %v418
        %v471 = vsub.f32 %v273, %v418
        %v472 = vsub.f32 %v274, %v419
        %v473 = vsub.f32 %v275, %v419
        %v474 = vsub.f32 %v276, %v420
        %v475 = vsub.f32 %v277, %v420
        %v476 = vsub.f32 %v278, %v421
        %v477 = vsub.f32 %v279, %v421
        %v478 = vsub.f32 %v280, %v422
        %v479 = vsub.f32 %v281, %v422
        %v480 = vsub.f32 %v282, %v423
        %v481 = vsub.f32 %v283, %v423
        %v482 = vsub.f32 %v284, %v424
        %v483 = vsub.f32 %v285, %v424
        %v484 = vsub.f32 %v286, %v425
        %v485 = vsub.f32 %v287, %v425
        %v486 = vsub.f32 %v288, %v426
        %v487 = vsub.f32 %v289, %v426
        %v488 = vsub.f32 %v290, %v427
        %v489 = vsub.f32 %v291, %v427
        %v490 = vsub.f32 %v292, %v428
        %v491 = vsub.f32 %v293, %v428
        %v492 = vsub.f32 %v294, %v429
        %v493 = vsub.f32 %v295, %v429
        %v494 = vsub.f32 %v296, %v430
        %v495 = vsub.f32 %v297, %v430
        %v496 = vsub.f32 %v298, %v431
        %v497 = vsub.f32 %v299, %v431
        %v498 = vmul.f32 %v432, %v432
        %v499 = vmul.f32 %v433, %v433
        %v500 = vmul.f32 %v434, %v434
        %v501 = vmul.f32 %v435, %v435
        %v502 = vmul.f32 %v436, %v436
        %v503 = vmul.f32 %v437, %v437
        %v504 = vmul.f32 %v438, %v438
        %v505 = vmul.f32 %v439, %v439
        %v506 = vmul.f32 %v440, %v440
        %v507 = vmul.f32 %v441, %v441
        %v508 = vmul.f32 %v442, %v442
        %v509 = vmul.f32 %v443, %v443
        %v510 = vmul.f32 %v444, %v444
        %v511 = vmul.f32 %v445, %v445
        %v512 = vmul.f32 %v446, %v446
        %v513 = vmul.f32 %v447, %v447
        %v514 = vmul.f32 %v448, %v448
        %v515 = vmul.f32 %v449, %v449
        %v516 = vmul.f32 %v450, %v450
        %v517 = vmul.f32 %v451, %v451
        %v518 = vmul.f32 %v452, %v452
        %v519 = vmul.f32 %v453, %v453
        %v520 = vmul.f32 %v454, %v454
        %v521 = vmul.f32 %v455, %v455
        %v522 = vmul.f32 %v456, %v456
        %v523 = vmul.f32 %v457, %v457
        %v524 = vmul.f32 %v458, %v458
        %v525 = vmul.f32 %v459, %v459
        %v526 = vmul.f32 %v460, %v460
        %v527 = vmul.f32 %v461, %v461
        %v528 = vmul.f32 %v462, %v462
        %v529 = vmul.f32 %v463, %v463
        %v530 = vmul.f32 %v464, %v464
        %v531 = vmul.f32 %v465, %v465
        %v532 = vmul.f32 %v466, %v466
        %v533 = vmul.f32 %v467, %v467
        %v534 = vmul.f32 %v468, %v468
        %v535 = vmul.f32 %v469, %v469
        %v536 = vmul.f32 %v470, %v470
        %v537 = vmul.f32 %v471, %v471
        %v538 = vmul.f32 %v472, %v472
        %v539 = vmul.f32 %v473, %v473
        %v540 = vmul.f32 %v474, %v474
        %v541 = vmul.f32 %v475, %v475
        %v542 = vmul.f32 %v476, %v476
        %v543 = vmul.f32 %v477, %v477
        %v544 = vmul.f32 %v478, %v478
        %v545 = vmul.f32 %v479, %v479
        %v546 = vmul.f32 %v480, %v480
        %v547 = vmul.f32 %v481, %v481
        %v548 = vmul.f32 %v482, %v482
        %v549 = vmul.f32 %v483, %v483
        %v550 = vmul.f32 %v484, %v484
        %v551 = vmul.f32 %v485, %v485
        %v552 = vmul.f32 %v486, %v486
        %v553 = vmul.f32 %v487, %v487
        %v554 = vmul.f32 %v488, %v488
        %v555 = vmul.f32 %v489, %v489
        %v556 = vmul.f32 %v490, %v490
        %v557 = vmul.f32 %v491, %v491
        %v558 = vmul.f32 %v492, %v492
        %v559 = vmul.f32 %v493, %v493
        %v560 = vmul.f32 %v494, %v494
        %v561 = vmul.f32 %v495, %v495
        %v562 = vmul.f32 %v496, %v496
        %v563 = vmul.f32 %v497, %v497
        %v564 = vadd.f32 %v498, %v499
        %565 = vadd.xlane.f32.xlu0 %v564
        %v566 = vpop.xlane.xlu0 %565
        %v567 = vadd.f32 %v500, %v501
        %568 = vadd.xlane.f32.xlu0 %v567
        %v569 = vpop.xlane.xlu0 %568
        %v570 = vadd.f32 %v502, %v503
        %571 = vadd.xlane.f32.xlu0 %v570
        %v572 = vpop.xlane.xlu0 %571
        %v573 = vadd.f32 %v504, %v505
        %574 = vadd.xlane.f32.xlu0 %v573
        %v575 = vpop.xlane.xlu0 %574
        %v576 = vadd.f32 %v506, %v507
        %577 = vadd.xlane.f32.xlu0 %v576
        %v578 = vpop.xlane.xlu0 %577
        %v579 = vadd.f32 %v508, %v509
        %580 = vadd.xlane.f32.xlu0 %v579
        %v581 = vpop.xlane.xlu0 %580
        %v582 = vadd.f32 %v510, %v511
        %583 = vadd.xlane.f32.xlu0 %v582
        %v584 = vpop.xlane.xlu0 %583
        %v585 = vadd.f32 %v512, %v513
        %586 = vadd.xlane.f32.xlu0 %v585
        %v587 = vpop.xlane.xlu0 %586
        %v588 = vadd.f32 %v514, %v515
        %589 = vadd.xlane.f32.xlu0 %v588
        %v590 = vpop.xlane.xlu0 %589
        %v591 = vadd.f32 %v516, %v517
        %592 = vadd.xlane.f32.xlu0 %v591
        %v593 = vpop.xlane.xlu0 %592
        %v594 = vadd.f32 %v518, %v519
        %595 = vadd.xlane.f32.xlu0 %v594
        %v596 = vpop.xlane.xlu0 %595
        %v597 = vadd.f32 %v520, %v521
        %598 = vadd.xlane.f32.xlu0 %v597
        %v599 = vpop.xlane.xlu0 %598
        %v600 = vadd.f32 %v522, %v523
        %601 = vadd.xlane.f32.xlu0 %v600
        %v602 = vpop.xlane.xlu0 %601
        %v603 = vadd.f32 %v524, %v525
        %604 = vadd.xlane.f32.xlu0 %v603
        %v605 = vpop.xlane.xlu0 %604
        %v606 = vadd.f32 %v526, %v527
        %607 = vadd.xlane.f32.xlu0 %v606
        %v608 = vpop.xlane.xlu0 %607
        %v609 = vadd.f32 %v528, %v529
        %610 = vadd.xlane.f32.xlu0 %v609
        %v611 = vpop.xlane.xlu0 %610
        %v612 = vadd.f32 %v530, %v531
        %613 = vadd.xlane.f32.xlu0 %v612
        %v614 = vpop.xlane.xlu0 %613
        %v615 = vadd.f32 %v532, %v533
        %616 = vadd.xlane.f32.xlu0 %v615
        %v617 = vpop.xlane.xlu0 %616
        %v618 = vadd.f32 %v534, %v535
        %619 = vadd.xlane.f32.xlu0 %v618
        %v620 = vpop.xlane.xlu0 %619
        %v621 = vadd.f32 %v536, %v537
        %622 = vadd.xlane.f32.xlu0 %v621
        %v623 = vpop.xlane.xlu0 %622
        %v624 = vadd.f32 %v538, %v539
        %625 = vadd.xlane.f32.xlu0 %v624
        %v626 = vpop.xlane.xlu0 %625
        %v627 = vadd.f32 %v540, %v541
        %628 = vadd.xlane.f32.xlu0 %v627
        %v629 = vpop.xlane.xlu0 %628
        %v630 = vadd.f32 %v542, %v543
        %631 = vadd.xlane.f32.xlu0 %v630
        %v632 = vpop.xlane.xlu0 %631
        %v633 = vadd.f32 %v544, %v545
        %634 = vadd.xlane.f32.xlu0 %v633
        %v635 = vpop.xlane.xlu0 %634
        %v636 = vadd.f32 %v546, %v547
        %637 = vadd.xlane.f32.xlu0 %v636
        %v638 = vpop.xlane.xlu0 %637
        %v639 = vadd.f32 %v548, %v549
        %640 = vadd.xlane.f32.xlu0 %v639
        %v641 = vpop.xlane.xlu0 %640
        %v642 = vadd.f32 %v550, %v551
        %643 = vadd.xlane.f32.xlu0 %v642
        %v644 = vpop.xlane.xlu0 %643
        %v645 = vadd.f32 %v552, %v553
        %646 = vadd.xlane.f32.xlu0 %v645
        %v647 = vpop.xlane.xlu0 %646
        %v648 = vadd.f32 %v554, %v555
        %649 = vadd.xlane.f32.xlu0 %v648
        %v650 = vpop.xlane.xlu0 %649
        %v651 = vadd.f32 %v556, %v557
        %652 = vadd.xlane.f32.xlu0 %v651
        %v653 = vpop.xlane.xlu0 %652
        %v654 = vadd.f32 %v558, %v559
        %655 = vadd.xlane.f32.xlu0 %v654
        %v656 = vpop.xlane.xlu0 %655
        %v657 = vadd.f32 %v560, %v561
        %658 = vadd.xlane.f32.xlu0 %v657
        %v659 = vpop.xlane.xlu0 %658
        %v660 = vadd.f32 %v562, %v563
        %661 = vadd.xlane.f32.xlu0 %v660
        %v662 = vpop.xlane.xlu0 %661
        %v663 = vmul.f32 %v566, 0.00390625
        %v664 = vmul.f32 %v569, 0.00390625
        %v665 = vmul.f32 %v572, 0.00390625
        %v666 = vmul.f32 %v575, 0.00390625
        %v667 = vmul.f32 %v578, 0.00390625
        %v668 = vmul.f32 %v581, 0.00390625
        %v669 = vmul.f32 %v584, 0.00390625
        %v670 = vmul.f32 %v587, 0.00390625
        %v671 = vmul.f32 %v590, 0.00390625
        %v672 = vmul.f32 %v593, 0.00390625
        %v673 = vmul.f32 %v596, 0.00390625
        %v674 = vmul.f32 %v599, 0.00390625
        %v675 = vmul.f32 %v602, 0.00390625
        %v676 = vmul.f32 %v605, 0.00390625
        %v677 = vmul.f32 %v608, 0.00390625
        %v678 = vmul.f32 %v611, 0.00390625
        %v679 = vmul.f32 %v614, 0.00390625
        %v680 = vmul.f32 %v617, 0.00390625
        %v681 = vmul.f32 %v620, 0.00390625
        %v682 = vmul.f32 %v623, 0.00390625
        %v683 = vmul.f32 %v626, 0.00390625
        %v684 = vmul.f32 %v629, 0.00390625
        %v685 = vmul.f32 %v632, 0.00390625
        %v686 = vmul.f32 %v635, 0.00390625
        %v687 = vmul.f32 %v638, 0.00390625
        %v688 = vmul.f32 %v641, 0.00390625
        %v689 = vmul.f32 %v644, 0.00390625
        %v690 = vmul.f32 %v647, 0.00390625
        %v691 = vmul.f32 %v650, 0.00390625
        %v692 = vmul.f32 %v653, 0.00390625
        %v693 = vmul.f32 %v656, 0.00390625
        %v694 = vmul.f32 %v659, 0.00390625
        %v695 = vmul.f32 %v662, 0.00390625
        %v696 = vadd.f32 %v663, 1e-05
        %v697 = vadd.f32 %v664, 1e-05
        %v698 = vadd.f32 %v665, 1e-05
        %v699 = vadd.f32 %v666, 1e-05
        %v700 = vadd.f32 %v667, 1e-05
        %v701 = vadd.f32 %v668, 1e-05
        %v702 = vadd.f32 %v669, 1e-05
        %v703 = vadd.f32 %v670, 1e-05
        %v704 = vadd.f32 %v671, 1e-05
        %v705 = vadd.f32 %v672, 1e-05
        %v706 = vadd.f32 %v673, 1e-05
        %v707 = vadd.f32 %v674, 1e-05
        %v708 = vadd.f32 %v675, 1e-05
        %v709 = vadd.f32 %v676, 1e-05
        %v710 = vadd.f32 %v677, 1e-05
        %v711 = vadd.f32 %v678, 1e-05
        %v712 = vadd.f32 %v679, 1e-05
        %v713 = vadd.f32 %v680, 1e-05
        %v714 = vadd.f32 %v681, 1e-05
        %v715 = vadd.f32 %v682, 1e-05
        %v716 = vadd.f32 %v683, 1e-05
        %v717 = vadd.f32 %v684, 1e-05
        %v718 = vadd.f32 %v685, 1e-05
        %v719 = vadd.f32 %v686, 1e-05
        %v720 = vadd.f32 %v687, 1e-05
        %v721 = vadd.f32 %v688, 1e-05
        %v722 = vadd.f32 %v689, 1e-05
        %v723 = vadd.f32 %v690, 1e-05
        %v724 = vadd.f32 %v691, 1e-05
        %v725 = vadd.f32 %v692, 1e-05
        %v726 = vadd.f32 %v693, 1e-05
        %v727 = vadd.f32 %v694, 1e-05
        %v728 = vadd.f32 %v695, 1e-05
        %v729 = vrsqrt.pop %v696
        %v730 = vrsqrt.pop %v697
        %v731 = vrsqrt.pop %v698
        %v732 = vrsqrt.pop %v699
        %v733 = vrsqrt.pop %v700
        %v734 = vrsqrt.pop %v701
        %v735 = vrsqrt.pop %v702
        %v736 = vrsqrt.pop %v703
        %v737 = vrsqrt.pop %v704
        %v738 = vrsqrt.pop %v705
        %v739 = vrsqrt.pop %v706
        %v740 = vrsqrt.pop %v707
        %v741 = vrsqrt.pop %v708
        %v742 = vrsqrt.pop %v709
        %v743 = vrsqrt.pop %v710
        %v744 = vrsqrt.pop %v711
        %v745 = vrsqrt.pop %v712
        %v746 = vrsqrt.pop %v713
        %v747 = vrsqrt.pop %v714
        %v748 = vrsqrt.pop %v715
        %v749 = vrsqrt.pop %v716
        %v750 = vrsqrt.pop %v717
        %v751 = vrsqrt.pop %v718
        %v752 = vrsqrt.pop %v719
        %v753 = vrsqrt.pop %v720
        %v754 = vrsqrt.pop %v721
        %v755 = vrsqrt.pop %v722
        %v756 = vrsqrt.pop %v723
        %v757 = vrsqrt.pop %v724
        %v758 = vrsqrt.pop %v725
        %v759 = vrsqrt.pop %v726
        %v760 = vrsqrt.pop %v727
        %v761 = vrsqrt.pop %v728
        %v762 = vmul.f32 %v432, %v729
        %v763 = vmul.f32 %v433, %v729
        %v764 = vmul.f32 %v434, %v730
        %v765 = vmul.f32 %v435, %v730
        %v766 = vmul.f32 %v436, %v731
        %v767 = vmul.f32 %v437, %v731
        %v768 = vmul.f32 %v438, %v732
        %v769 = vmul.f32 %v439, %v732
        %v770 = vmul.f32 %v440, %v733
        %v771 = vmul.f32 %v441, %v733
        %v772 = vmul.f32 %v442, %v734
        %v773 = vmul.f32 %v443, %v734
        %v774 = vmul.f32 %v444, %v735
        %v775 = vmul.f32 %v445, %v735
        %v776 = vmul.f32 %v446, %v736
        %v777 = vmul.f32 %v447, %v736
        %v778 = vmul.f32 %v448, %v737
        %v779 = vmul.f32 %v449, %v737
        %v780 = vmul.f32 %v450, %v738
        %v781 = vmul.f32 %v451, %v738
        %v782 = vmul.f32 %v452, %v739
        %v783 = vmul.f32 %v453, %v739
        %v784 = vmul.f32 %v454, %v740
        %v785 = vmul.f32 %v455, %v740
        %v786 = vmul.f32 %v456, %v741
        %v787 = vmul.f32 %v457, %v741
        %v788 = vmul.f32 %v458, %v742
        %v789 = vmul.f32 %v459, %v742
        %v790 = vmul.f32 %v460, %v743
        %v791 = vmul.f32 %v461, %v743
        %v792 = vmul.f32 %v462, %v744
        %v793 = vmul.f32 %v463, %v744
        %v794 = vmul.f32 %v464, %v745
        %v795 = vmul.f32 %v465, %v745
        %v796 = vmul.f32 %v466, %v746
        %v797 = vmul.f32 %v467, %v746
        %v798 = vmul.f32 %v468, %v747
        %v799 = vmul.f32 %v469, %v747
        %v800 = vmul.f32 %v470, %v748
        %v801 = vmul.f32 %v471, %v748
        %v802 = vmul.f32 %v472, %v749
        %v803 = vmul.f32 %v473, %v749
        %v804 = vmul.f32 %v474, %v750
        %v805 = vmul.f32 %v475, %v750
        %v806 = vmul.f32 %v476, %v751
        %v807 = vmul.f32 %v477, %v751
        %v808 = vmul.f32 %v478, %v752
        %v809 = vmul.f32 %v479, %v752
        %v810 = vmul.f32 %v480, %v753
        %v811 = vmul.f32 %v481, %v753
        %v812 = vmul.f32 %v482, %v754
        %v813 = vmul.f32 %v483, %v754
        %v814 = vmul.f32 %v484, %v755
        %v815 = vmul.f32 %v485, %v755
        %v816 = vmul.f32 %v486, %v756
        %v817 = vmul.f32 %v487, %v756
        %v818 = vmul.f32 %v488, %v757
        %v819 = vmul.f32 %v489, %v757
        %v820 = vmul.f32 %v490, %v758
        %v821 = vmul.f32 %v491, %v758
        %v822 = vmul.f32 %v492, %v759
        %v823 = vmul.f32 %v493, %v759
        %v824 = vmul.f32 %v494, %v760
        %v825 = vmul.f32 %v495, %v760
        %v826 = vmul.f32 %v496, %v761
        %v827 = vmul.f32 %v497, %v761
        %v828 = vld [vmem:[#allocation5] sm:$0x3]
        %v830 = vlaneseq
        %v831 = vshrl.u32 %v830, 7
        %v832 = vsub.s32 0, %v831
        %v833 = vrot.slane %v828, %v832
        %v834 = vlaneseq
        %v835 = vshrl.u32 %v834, 7
        %v836 = vsub.s32 1, %v835
        %v837 = vrot.slane %v828, %v836
        %v840 = vmul.f32 %v762, %v833
        %v841 = vmul.f32 %v763, %v837
        %v842 = vmul.f32 %v764, %v833
        %v843 = vmul.f32 %v765, %v837
        %v844 = vmul.f32 %v766, %v833
        %v845 = vmul.f32 %v767, %v837
        %v846 = vmul.f32 %v768, %v833
        %v847 = vmul.f32 %v769, %v837
        %v848 = vmul.f32 %v770, %v833
        %v849 = vmul.f32 %v771, %v837
        %v850 = vmul.f32 %v772, %v833
        %v851 = vmul.f32 %v773, %v837
        %v852 = vmul.f32 %v774, %v833
        %v853 = vmul.f32 %v775, %v837
        %v854 = vmul.f32 %v776, %v833
        %v855 = vmul.f32 %v777, %v837
        %v856 = vmul.f32 %v778, %v833
        %v857 = vmul.f32 %v779, %v837
        %v858 = vmul.f32 %v780, %v833
        %v859 = vmul.f32 %v781, %v837
        %v860 = vmul.f32 %v782, %v833
        %v861 = vmul.f32 %v783, %v837
        %v862 = vmul.f32 %v784, %v833
        %v863 = vmul.f32 %v785, %v837
        %v864 = vmul.f32 %v786, %v833
        %v865 = vmul.f32 %v787, %v837
        %v866 = vmul.f32 %v788, %v833
        %v867 = vmul.f32 %v789, %v837
        %v868 = vmul.f32 %v790, %v833
        %v869 = vmul.f32 %v791, %v837
        %v870 = vmul.f32 %v792, %v833
        %v871 = vmul.f32 %v793, %v837
        %v872 = vmul.f32 %v794, %v833
        %v873 = vmul.f32 %v795, %v837
        %v874 = vmul.f32 %v796, %v833
        %v875 = vmul.f32 %v797, %v837
        %v876 = vmul.f32 %v798, %v833
        %v877 = vmul.f32 %v799, %v837
        %v878 = vmul.f32 %v800, %v833
        %v879 = vmul.f32 %v801, %v837
        %v880 = vmul.f32 %v802, %v833
        %v881 = vmul.f32 %v803, %v837
        %v882 = vmul.f32 %v804, %v833
        %v883 = vmul.f32 %v805, %v837
        %v884 = vmul.f32 %v806, %v833
        %v885 = vmul.f32 %v807, %v837
        %v886 = vmul.f32 %v808, %v833
        %v887 = vmul.f32 %v809, %v837
        %v888 = vmul.f32 %v810, %v833
        %v889 = vmul.f32 %v811, %v837
        %v890 = vmul.f32 %v812, %v833
        %v891 = vmul.f32 %v813, %v837
        %v892 = vmul.f32 %v814, %v833
        %v893 = vmul.f32 %v815, %v837
        %v894 = vmul.f32 %v816, %v833
        %v895 = vmul.f32 %v817, %v837
        %v896 = vmul.f32 %v818, %v833
        %v897 = vmul.f32 %v819, %v837
        %v898 = vmul.f32 %v820, %v833
        %v899 = vmul.f32 %v821, %v837
        %v900 = vmul.f32 %v822, %v833
        %v901 = vmul.f32 %v823, %v837
        %v902 = vmul.f32 %v824, %v833
        %v903 = vmul.f32 %v825, %v837
        %v904 = vmul.f32 %v826, %v833
        %v905 = vmul.f32 %v827, %v837
        %v906 = vld [vmem:[#allocation7] sm:$0x3]
        %v908 = vlaneseq
        %v909 = vshrl.u32 %v908, 7
        %v910 = vsub.s32 0, %v909
        %v911 = vrot.slane %v906, %v910
        %v912 = vlaneseq
        %v913 = vshrl.u32 %v912, 7
        %v914 = vsub.s32 1, %v913
        %v915 = vrot.slane %v906, %v914
        %v918 = vadd.f32 %v840, %v911
        %v919 = vadd.f32 %v841, %v915
        %v920 = vadd.f32 %v842, %v911
        %v921 = vadd.f32 %v843, %v915
        %v922 = vadd.f32 %v844, %v911
        %v923 = vadd.f32 %v845, %v915
        %v924 = vadd.f32 %v846, %v911
        %v925 = vadd.f32 %v847, %v915
        %v926 = vadd.f32 %v848, %v911
        %v927 = vadd.f32 %v849, %v915
        %v928 = vadd.f32 %v850, %v911
        %v929 = vadd.f32 %v851, %v915
        %v930 = vadd.f32 %v852, %v911
        %v931 = vadd.f32 %v853, %v915
        %v932 = vadd.f32 %v854, %v911
        %v933 = vadd.f32 %v855, %v915
        %v934 = vadd.f32 %v856, %v911
        %v935 = vadd.f32 %v857, %v915
        %v936 = vadd.f32 %v858, %v911
        %v937 = vadd.f32 %v859, %v915
        %v938 = vadd.f32 %v860, %v911
        %v939 = vadd.f32 %v861, %v915
        %v940 = vadd.f32 %v862, %v911
        %v941 = vadd.f32 %v863, %v915
        %v942 = vadd.f32 %v864, %v911
        %v943 = vadd.f32 %v865, %v915
        %v944 = vadd.f32 %v866, %v911
        %v945 = vadd.f32 %v867, %v915
        %v946 = vadd.f32 %v868, %v911
        %v947 = vadd.f32 %v869, %v915
        %v948 = vadd.f32 %v870, %v911
        %v949 = vadd.f32 %v871, %v915
        %v950 = vadd.f32 %v872, %v911
        %v951 = vadd.f32 %v873, %v915
        %v952 = vadd.f32 %v874, %v911
        %v953 = vadd.f32 %v875, %v915
        %v954 = vadd.f32 %v876, %v911
        %v955 = vadd.f32 %v877, %v915
        %v956 = vadd.f32 %v878, %v911
        %v957 = vadd.f32 %v879, %v915
        %v958 = vadd.f32 %v880, %v911
        %v959 = vadd.f32 %v881, %v915
        %v960 = vadd.f32 %v882, %v911
        %v961 = vadd.f32 %v883, %v915
        %v962 = vadd.f32 %v884, %v911
        %v963 = vadd.f32 %v885, %v915
        %v964 = vadd.f32 %v886, %v911
        %v965 = vadd.f32 %v887, %v915
        %v966 = vadd.f32 %v888, %v911
        %v967 = vadd.f32 %v889, %v915
        %v968 = vadd.f32 %v890, %v911
        %v969 = vadd.f32 %v891, %v915
        %v970 = vadd.f32 %v892, %v911
        %v971 = vadd.f32 %v893, %v915
        %v972 = vadd.f32 %v894, %v911
        %v973 = vadd.f32 %v895, %v915
        %v974 = vadd.f32 %v896, %v911
        %v975 = vadd.f32 %v897, %v915
        %v976 = vadd.f32 %v898, %v911
        %v977 = vadd.f32 %v899, %v915
        %v978 = vadd.f32 %v900, %v911
        %v979 = vadd.f32 %v901, %v915
        %v980 = vadd.f32 %v902, %v911
        %v981 = vadd.f32 %v903, %v915
        %v982 = vadd.f32 %v904, %v911
        %v983 = vadd.f32 %v905, %v915
        %984 = vst [vmem:[%s221] sm:$0xff] %v918
        %985 = vst [vmem:[%s221 + $0x8] sm:$0xff] %v919
        %986 = vst [vmem:[%s221 + $0x10] sm:$0xff] %v920
        %987 = vst [vmem:[%s221 + $0x18] sm:$0xff] %v921
        %988 = vst [vmem:[%s221 + $0x20] sm:$0xff] %v922
        %989 = vst [vmem:[%s221 + $0x28] sm:$0xff] %v923
        %990 = vst [vmem:[%s221 + $0x30] sm:$0xff] %v924
        %991 = vst [vmem:[%s221 + $0x38] sm:$0xff] %v925
        %992 = vst [vmem:[%s221 + $0x40] sm:$0xff] %v926
        %993 = vst [vmem:[%s221 + $0x48] sm:$0xff] %v927
        %994 = vst [vmem:[%s221 + $0x50] sm:$0xff] %v928
        %995 = vst [vmem:[%s221 + $0x58] sm:$0xff] %v929
        %996 = vst [vmem:[%s221 + $0x60] sm:$0xff] %v930
        %997 = vst [vmem:[%s221 + $0x68] sm:$0xff] %v931
        %998 = vst [vmem:[%s221 + $0x70] sm:$0xff] %v932
        %999 = vst [vmem:[%s221 + $0x78] sm:$0xff] %v933
        %1000 = vst [vmem:[%s221 + $0x80] sm:$0xff] %v934
        %1001 = vst [vmem:[%s221 + $0x88] sm:$0xff] %v935
        %1002 = vst [vmem:[%s221 + $0x90] sm:$0xff] %v936
        %1003 = vst [vmem:[%s221 + $0x98] sm:$0xff] %v937
        %1004 = vst [vmem:[%s221 + $0xa0] sm:$0xff] %v938
        %1005 = vst [vmem:[%s221 + $0xa8] sm:$0xff] %v939
        %1006 = vst [vmem:[%s221 + $0xb0] sm:$0xff] %v940
        %1007 = vst [vmem:[%s221 + $0xb8] sm:$0xff] %v941
        %1008 = vst [vmem:[%s221 + $0xc0] sm:$0xff] %v942
        %1009 = vst [vmem:[%s221 + $0xc8] sm:$0xff] %v943
        %1010 = vst [vmem:[%s221 + $0xd0] sm:$0xff] %v944
        %1011 = vst [vmem:[%s221 + $0xd8] sm:$0xff] %v945
        %1012 = vst [vmem:[%s221 + $0xe0] sm:$0xff] %v946
        %1013 = vst [vmem:[%s221 + $0xe8] sm:$0xff] %v947
        %1014 = vst [vmem:[%s221 + $0xf0] sm:$0xff] %v948
        %1015 = vst [vmem:[%s221 + $0xf8] sm:$0xff] %v949
        %1016 = vst [vmem:[%s221 + $0x100] sm:$0xff] %v950
        %1017 = vst [vmem:[%s221 + $0x108] sm:$0xff] %v951
        %1018 = vst [vmem:[%s221 + $0x110] sm:$0xff] %v952
        %1019 = vst [vmem:[%s221 + $0x118] sm:$0xff] %v953
        %1020 = vst [vmem:[%s221 + $0x120] sm:$0xff] %v954
        %1021 = vst [vmem:[%s221 + $0x128] sm:$0xff] %v955
        %1022 = vst [vmem:[%s221 + $0x130] sm:$0xff] %v956
        %1023 = vst [vmem:[%s221 + $0x138] sm:$0xff] %v957
        %1024 = vst [vmem:[%s221 + $0x140] sm:$0xff] %v958
        %1025 = vst [vmem:[%s221 + $0x148] sm:$0xff] %v959
        %1026 = vst [vmem:[%s221 + $0x150] sm:$0xff] %v960
        %1027 = vst [vmem:[%s221 + $0x158] sm:$0xff] %v961
        %1028 = vst [vmem:[%s221 + $0x160] sm:$0xff] %v962
        %1029 = vst [vmem:[%s221 + $0x168] sm:$0xff] %v963
        %1030 = vst [vmem:[%s221 + $0x170] sm:$0xff] %v964
        %1031 = vst [vmem:[%s221 + $0x178] sm:$0xff] %v965
        %1032 = vst [vmem:[%s221 + $0x180] sm:$0xff] %v966
        %1033 = vst [vmem:[%s221 + $0x188] sm:$0xff] %v967
        %1034 = vst [vmem:[%s221 + $0x190] sm:$0xff] %v968
        %1035 = vst [vmem:[%s221 + $0x198] sm:$0xff] %v969
        %1036 = vst [vmem:[%s221 + $0x1a0] sm:$0xff] %v970
        %1037 = vst [vmem:[%s221 + $0x1a8] sm:$0xff] %v971
        %1038 = vst [vmem:[%s221 + $0x1b0] sm:$0xff] %v972
        %1039 = vst [vmem:[%s221 + $0x1b8] sm:$0xff] %v973
        %1040 = vst [vmem:[%s221 + $0x1c0] sm:$0xff] %v974
        %1041 = vst [vmem:[%s221 + $0x1c8] sm:$0xff] %v975
        %1042 = vst [vmem:[%s221 + $0x1d0] sm:$0xff] %v976
        %1043 = vst [vmem:[%s221 + $0x1d8] sm:$0xff] %v977
        %1044 = vst [vmem:[%s221 + $0x1e0] sm:$0xff] %v978
        %1045 = vst [vmem:[%s221 + $0x1e8] sm:$0xff] %v979
        %1046 = vst [vmem:[%s221 + $0x1f0] sm:$0xff] %v980
        %1047 = vst [vmem:[%s221 + $0x1f8] sm:$0xff] %v981
        %1048 = vst [vmem:[%s221 + $0x200] sm:$0xff] %v982
        %1049 = vst [vmem:[%s221 + $0x208] sm:$0xff] %v983
        %s1050 = sand.u32 %s97, 1
        %s1051 = scalar_lea.sflag [#allocation4], %s1050
        %s1052 = sand.u32 %s97, 1
        %s1053 = smul.addr %s1052, 528
        %s1054 = scalar_lea.vmem [#allocation8], %s1053
        // Predicated region
        $region45: #{tpu_custom_call.1} parent=31 // pred_check
          %p1055 = pneg %p107
        $region46: #{tpu_custom_call.1} parent=31 // pred_check_branch
          %1057 = sbr.rel (%p1055) target = $region48
        $region47: #{tpu_custom_call.1} parent=31 // pred_region
          %s1058 = smul.u32 33, %s21
          %s1059 = ssub.s32 263, %s1058
          %p1060 = scmp.lt.s32.totalorder %s1059, 33
          %s1061 = scalar_select %p1060, %s1059, 33
          %s1062 = smul.u32 128, %s1061
          %s1063 = smul.u32 %s1062, 2
          %s1065 = ssub.s32 8448, %s1063
          %1066 = vsyncadd %s1051, %s1065
          %p1067 = scmp.ne.s32.totalorder 0, %s1063
          %s1068 = smul.addr %s1058, 2
          %s1069 = smul.addr %s1068, 128
          %s1070 = scalar_lea.hbm %s3, %s1069
          %s1071 = smul.u32 16, %s1061
          %s1072 = sshll.u32 %s1054, 4
          %s1073 = int_to_ptr.vmem [resolvable:$true] %s1072
          %s1074 = sshll.u32 %s1071, 4
          %1078 = dma.vmem_to_hbm [thread:$0]  (%p1067), %s1073, %s1074, %s1070, %s1051, 256, 256, 16
        $region48: #{tpu_custom_call.1} parent=31 // pred_fallthru
          _
      $region32: #{tpu_custom_call.1} parent=5 // pred_fallthru
        _
      %p1079 = scmp.le.s32.totalorder 2, %s16
      // Predicated region
      $region49: #{tpu_custom_call.1} parent=5 // pred_check
        %p1080 = pneg %p1079
      $region50: #{tpu_custom_call.1} parent=5 // pred_check_branch
        %1082 = sbr.rel (%p1080) target = $region52
      $region51: #{tpu_custom_call.1} parent=5 // pred_region
        %s1083 = ssub.s32 %s16, 2
        // Predicated region
        $region53: #{tpu_custom_call.1} parent=51 // pred_check
          %p1084 = pneg %p113
        $region54: #{tpu_custom_call.1} parent=51 // pred_check_branch
          %1086 = sbr.rel (%p1084) target = $region56
        $region55: #{tpu_custom_call.1} parent=51 // pred_region
          %s1087 = sand.u32 %s98, 1
          %s1088 = scalar_lea.sflag [#allocation4], %s1087
          %s1089 = sand.u32 %s98, 1
          %s1090 = smul.addr %s1089, 528
          %s1091 = scalar_lea.vmem [#allocation8], %s1090
          %1092 = dma.done %s1088, 8448
        $region56: #{tpu_custom_call.1} parent=51 // pred_fallthru
          _
      $region52: #{tpu_custom_call.1} parent=5 // pred_fallthru
        _
    $region6: #{tpu_custom_call.1} parent=1 // loop_footer
      %s20 = sadd.s32 1, %s16
    $region7: #{tpu_custom_call.1} parent=1 // loop_footer_branch
      %15 = sbr.rel target = $region3
    $region8: #{tpu_custom_call.1} parent=1 // loop_exit
      _
    %1093 = vsyncpa [#allocation3], 1
    %s1094 = scalar_lea.sflag [#allocation3], 1
    %1095 = vsyncpa %s1094, 1
    %1096 = vsyncpa [#allocation6], 1
    %1097 = vsyncpa [#allocation4], 1
    %s1098 = scalar_lea.sflag [#allocation4], 1
    %1099 = vsyncpa %s1098, 1

</llo_original>
